<compile_context>
chip_gen: v6e
topology: v6e:2x2x1
jax: 0.10.0
libtpu: 0.0.40
codegen_flags: <defaults>
</compile_context>

<pallas_src>
import functools

import jax
import jax.numpy as jnp
from jax.experimental import pallas as pl
from jax.experimental.pallas import tpu as pltpu


# ----------------------------- Pallas kernel -------------------------------

def _gru_rnn_kernel(x_ref, wih_ref, bih_ref, whh_ref, bhn_ref,
                    wout_ref, bout_ref, out_ref, hs_ref, *, seq_len, batch):
    """Full GruRNN forward (GRU recurrence + folded MLP head), one invocation.

    x_ref    : (S*B, I)  inputs, flattened seq-first (reshape done in wrapper)
    wih_ref  : (I, 3H)   fused input->hidden weights, gate columns [r | z | n]
    bih_ref  : (1, 3H)   fused biases: [b_ir+b_hr | b_iz+b_hz | b_in]
    whh_ref  : (H, 3H)   fused hidden->hidden weights, gate columns [r | z | n]
    bhn_ref  : (1, H)    b_hn (must stay inside the r*(...) term)
    wout_ref : (H, O)    folded head weight  = W1^T @ W2^T
    bout_ref : (1, O)    folded head bias    = b1 @ W2^T + b2
    out_ref  : (S*B, O)  outputs (wrapper reshapes back to (S, B, O))
    hs_ref   : (S*B, H)  f32 VMEM scratch holding the h_t history
    """
    S, B = seq_len, batch
    H = whh_ref.shape[0]

    # Weights: load once, stay resident for the whole sequence.
    wih = wih_ref[...]
    bih = bih_ref[...]
    whh = whh_ref[...]
    bhn = bhn_ref[...]
    wout = wout_ref[...]
    bout = bout_ref[...]

    # (1) x-side projection hoisted out of the recurrence: one MXU push for the
    #     whole sequence.  Off the serial h-chain, so it overlaps freely.
    ig_all = jnp.dot(x_ref[...], wih,
                     preferred_element_type=jnp.float32) + bih        # (S*B, 3H)

    h = jnp.zeros((B, H), jnp.float32)

    # Statically unrolled time loop (S is small & static).  Only the h@whh dot,
    # the fused sigmoid/tanh and the gate arithmetic sit on the serial chain.
    for t in range(S):
        ig = ig_all[t * B:(t + 1) * B]                                  # (B, 3H)
        hg = jnp.dot(h, whh, preferred_element_type=jnp.float32)       # (B, 3H)

        # (3) one fused sigmoid over [r | z]  (single EUP pass, lane offset 0).
        rz = jax.nn.sigmoid(ig[:, :2 * H] + hg[:, :2 * H])
        r = rz[:, :H]
        z = rz[:, H:]
        n = jnp.tanh(ig[:, 2 * H:] + r * (hg[:, 2 * H:] + bhn))
        # (4) cheaper update: h = n + z*(h - n)  ==  (1-z)*n + z*h
        h = n + z * (h - n)

        # (2) stash h_t; the head projection is deferred past the loop.
        hs_ref[t * B:(t + 1) * B, :] = h

    # (2) deferred, folded MLP head: ONE (S*B,H)@(H,O) dot + bias, then ONE
    #     contiguous store of the whole output block.
    y = jnp.dot(hs_ref[...], wout, preferred_element_type=jnp.float32) + bout
    out_ref[...] = y.astype(out_ref.dtype)


# ------------------------------ Wrapper -------------------------------------

def fuse_params(p):
    """One-time weight preprocessing: fuse gates, pre-sum biases, fold the head."""
    H = p["w_hh"].shape[1]
    wih = p["w_ih"].T          # (I, 3H), columns in gate order [r, z, n]
    whh = p["w_hh"].T          # (H, 3H)
    b_ih, b_hh = p["b_ih"], p["b_hh"]
    # Pre-sum hidden biases for r and z into the input-side bias; b_hn must stay
    # inside the r * (h @ W_hn + b_hn) term (PyTorch GRU semantics).
    bih = jnp.concatenate([b_ih[:H] + b_hh[:H],
                           b_ih[H:2 * H] + b_hh[H:2 * H],
                           b_ih[2 * H:]])[None, :]            # (1, 3H)
    bhn = b_hh[2 * H:][None, :]                               # (1, H)
    # Fold Linear(H,16) -> Linear(16,O): exact (no nonlinearity in between).
    wout = p["w1"].T @ p["w2"].T                              # (H, O)
    bout = (p["b1"] @ p["w2"].T + p["b2"])[None, :]           # (1, O)
    return {"wih": wih, "bih": bih, "whh": whh, "bhn": bhn,
            "wout": wout, "bout": bout}


def gru_rnn_forward(x, fused):
    """x: (S, B, I) float32 -> (S, B, O) float32."""
    S, B, I = x.shape
    H = fused["whh"].shape[0]
    O = fused["wout"].shape[1]

    # Free layout reshape outside the kernel: the kernel works on (S*B, I).
    x2 = x.reshape(S * B, I)

    vmem_spec = pl.BlockSpec(memory_space=pltpu.MemorySpace.VMEM)
    kernel = functools.partial(_gru_rnn_kernel, seq_len=S, batch=B)
    y2 = pl.pallas_call(
        kernel,
        out_shape=jax.ShapeDtypeStruct((S * B, O), jnp.float32),
        in_specs=[vmem_spec] * 7,
        out_specs=vmem_spec,
        scratch_shapes=[pltpu.VMEM((S * B, H), jnp.float32)],   # h_t history
    )(x2, fused["wih"], fused["bih"], fused["whh"], fused["bhn"],
      fused["wout"], fused["bout"])
    return y2.reshape(S, B, O)


# -------------------------- Pure-JAX reference -------------------------------

def gru_rnn_ref(x, p):
    """Direct transcription of the PyTorch module from the *unfused* params."""
    S, B, _ = x.shape
    H = p["w_hh"].shape[1]
    W_ir, W_iz, W_in = jnp.split(p["w_ih"], 3, axis=0)
    W_hr, W_hz, W_hn = jnp.split(p["w_hh"], 3, axis=0)
    b_ir, b_iz, b_in = jnp.split(p["b_ih"], 3)
    b_hr, b_hz, b_hn = jnp.split(p["b_hh"], 3)
    h = jnp.zeros((B, H), jnp.float32)
    outs = []
    for t in range(S):
        xt = x[t]
        r = jax.nn.sigmoid(xt @ W_ir.T + b_ir + h @ W_hr.T + b_hr)
        z = jax.nn.sigmoid(xt @ W_iz.T + b_iz + h @ W_hz.T + b_hz)
        n = jnp.tanh(xt @ W_in.T + b_in + r * (h @ W_hn.T + b_hn))
        h = (1.0 - z) * n + z * h
        y = (h @ p["w1"].T + p["b1"]) @ p["w2"].T + p["b2"]
        outs.append(y)
    return jnp.stack(outs, axis=0)


# ----------------------------- Param init ------------------------------------

def init_params(key, input_size, hidden_size, output_size):
    """PyTorch-layout params with uniform(-1/sqrt(fan), 1/sqrt(fan)) init."""
    ks = jax.random.split(key, 8)
    kH = 1.0 / jnp.sqrt(hidden_size)
    k1 = 1.0 / jnp.sqrt(hidden_size)   # linear1 fan_in = hidden_size
    k2 = 1.0 / jnp.sqrt(16.0)          # linear2 fan_in = 16
    u = lambda k, shape, lim: jax.random.uniform(
        k, shape, jnp.float32, minval=-lim, maxval=lim)
    return {
        # nn.GRU layout: gate order [r, z, n] stacked along dim 0.
        "w_ih": u(ks[0], (3 * hidden_size, input_size), kH),
        "w_hh": u(ks[1], (3 * hidden_size, hidden_size), kH),
        "b_ih": u(ks[2], (3 * hidden_size,), kH),
        "b_hh": u(ks[3], (3 * hidden_size,), kH),
        # nn.Linear layout: (out_features, in_features).
        "w1": u(ks[4], (16, hidden_size), k1),
        "b1": u(ks[5], (16,), k1),
        "w2": u(ks[6], (output_size, 16), k2),
        "b2": u(ks[7], (output_size,), k2),
    }


# --------------------------------- Main ---------------------------------------

if __name__ == "__main__":
    SEQ, BATCH, INPUT, HIDDEN, OUTPUT = 8, 2, 8, 32, 4

    key = jax.random.PRNGKey(0)
    kx, kp = jax.random.split(key)
    x = jax.random.normal(kx, (SEQ, BATCH, INPUT), jnp.float32)
    params = init_params(kp, INPUT, HIDDEN, OUTPUT)
    fused = fuse_params(params)

    out = jax.block_until_ready(gru_rnn_forward(x, fused))
    ref = jax.block_until_ready(gru_rnn_ref(x, params))

    assert out.shape == (SEQ, BATCH, OUTPUT)
    assert jnp.allclose(out, ref, atol=1e-5, rtol=1e-4), "mismatch vs reference"

    print("KERNEL_OK")
</pallas_src>

<mosaic_0001>
module attributes {stable_mosaic.version = 11 : i64} {
  func.func @_gru_rnn_kernel(%arg0: memref<16x8xf32, #tpu.memory_space<vmem>>, %arg1: memref<8x96xf32, #tpu.memory_space<vmem>>, %arg2: memref<1x96xf32, #tpu.memory_space<vmem>>, %arg3: memref<32x96xf32, #tpu.memory_space<vmem>>, %arg4: memref<1x32xf32, #tpu.memory_space<vmem>>, %arg5: memref<32x4xf32, #tpu.memory_space<vmem>>, %arg6: memref<1x4xf32, #tpu.memory_space<vmem>>, %arg7: memref<16x4xf32, #tpu.memory_space<vmem>>, %arg8: memref<16x32xf32, #tpu.memory_space<vmem>>) attributes {dimension_semantics = [], scalar_prefetch = 0 : i64, scratch_operands = 1 : i64, tpu.core_type = #tpu.core_type<tc>} {
    %c0 = arith.constant 0 : index
    %c0_0 = arith.constant 0 : index
    %0 = vector.load %arg1[%c0, %c0_0] : memref<8x96xf32, #tpu.memory_space<vmem>>, vector<8x96xf32>
    %c0_1 = arith.constant 0 : index
    %c0_2 = arith.constant 0 : index
    %1 = vector.load %arg2[%c0_1, %c0_2] : memref<1x96xf32, #tpu.memory_space<vmem>>, vector<1x96xf32>
    %c0_3 = arith.constant 0 : index
    %c0_4 = arith.constant 0 : index
    %2 = vector.load %arg3[%c0_3, %c0_4] : memref<32x96xf32, #tpu.memory_space<vmem>>, vector<32x96xf32>
    %c0_5 = arith.constant 0 : index
    %c0_6 = arith.constant 0 : index
    %3 = vector.load %arg4[%c0_5, %c0_6] : memref<1x32xf32, #tpu.memory_space<vmem>>, vector<1x32xf32>
    %c0_7 = arith.constant 0 : index
    %c0_8 = arith.constant 0 : index
    %4 = vector.load %arg5[%c0_7, %c0_8] : memref<32x4xf32, #tpu.memory_space<vmem>>, vector<32x4xf32>
    %c0_9 = arith.constant 0 : index
    %c0_10 = arith.constant 0 : index
    %5 = vector.load %arg6[%c0_9, %c0_10] : memref<1x4xf32, #tpu.memory_space<vmem>>, vector<1x4xf32>
    %c0_11 = arith.constant 0 : index
    %c0_12 = arith.constant 0 : index
    %6 = vector.load %arg0[%c0_11, %c0_12] : memref<16x8xf32, #tpu.memory_space<vmem>>, vector<16x8xf32>
    %cst = arith.constant dense<0.000000e+00> : vector<16x96xf32>
    %7 = tpu.matmul %6, %0, %cst {dimension_numbers = #tpu.dot_dimension_numbers<[1], [0], [0], [1], [0, 0, 1, 1], [], []>} : vector<16x8xf32>, vector<8x96xf32>, vector<16x96xf32> -> vector<16x96xf32>
    %8 = vector.broadcast %1 : vector<1x96xf32> to vector<16x96xf32>
    %9 = arith.addf %7, %8 : vector<16x96xf32>
    %cst_13 = arith.constant 0.000000e+00 : f32
    %10 = vector.broadcast %cst_13 : f32 to vector<2x32xf32>
    %11 = vector.extract_strided_slice %9 {offsets = [0, 0], sizes = [2, 96], strides = [1, 1]} : vector<16x96xf32> to vector<2x96xf32>
    %cst_14 = arith.constant dense<0.000000e+00> : vector<2x96xf32>
    %12 = tpu.matmul %10, %2, %cst_14 {dimension_numbers = #tpu.dot_dimension_numbers<[1], [0], [0], [1], [0, 0, 1, 1], [], []>} : vector<2x32xf32>, vector<32x96xf32>, vector<2x96xf32> -> vector<2x96xf32>
    %13 = vector.extract_strided_slice %11 {offsets = [0, 0], sizes = [2, 64], strides = [1, 1]} : vector<2x96xf32> to vector<2x64xf32>
    %14 = vector.extract_strided_slice %12 {offsets = [0, 0], sizes = [2, 64], strides = [1, 1]} : vector<2x96xf32> to vector<2x64xf32>
    %15 = arith.addf %13, %14 : vector<2x64xf32>
    %16 = arith.negf %15 : vector<2x64xf32>
    %17 = math.exp %16 : vector<2x64xf32>
    %cst_15 = arith.constant 1.000000e+00 : f32
    %18 = vector.broadcast %cst_15 : f32 to vector<2x64xf32>
    %19 = arith.addf %18, %17 : vector<2x64xf32>
    %20 = arith.divf %18, %19 : vector<2x64xf32>
    %21 = vector.extract_strided_slice %20 {offsets = [0, 0], sizes = [2, 32], strides = [1, 1]} : vector<2x64xf32> to vector<2x32xf32>
    %22 = vector.extract_strided_slice %20 {offsets = [0, 32], sizes = [2, 32], strides = [1, 1]} : vector<2x64xf32> to vector<2x32xf32>
    %23 = vector.extract_strided_slice %11 {offsets = [0, 64], sizes = [2, 32], strides = [1, 1]} : vector<2x96xf32> to vector<2x32xf32>
    %24 = vector.extract_strided_slice %12 {offsets = [0, 64], sizes = [2, 32], strides = [1, 1]} : vector<2x96xf32> to vector<2x32xf32>
    %25 = vector.broadcast %3 : vector<1x32xf32> to vector<2x32xf32>
    %26 = arith.addf %24, %25 : vector<2x32xf32>
    %27 = arith.mulf %21, %26 : vector<2x32xf32>
    %28 = arith.addf %23, %27 : vector<2x32xf32>
    %29 = math.tanh %28 : vector<2x32xf32>
    %30 = arith.subf %10, %29 : vector<2x32xf32>
    %31 = arith.mulf %22, %30 : vector<2x32xf32>
    %32 = arith.addf %29, %31 : vector<2x32xf32>
    %c0_16 = arith.constant 0 : index
    %c0_17 = arith.constant 0 : index
    %33 = vector.load %arg8[%c0_16, %c0_17] : memref<16x32xf32, #tpu.memory_space<vmem>>, vector<2x32xf32>
    tpu.vector_store %arg8[%c0_16, %c0_17], %32 {strides = array<i32>} : memref<16x32xf32, #tpu.memory_space<vmem>>, vector<2x32xf32>,
    %34 = vector.extract_strided_slice %9 {offsets = [2, 0], sizes = [2, 96], strides = [1, 1]} : vector<16x96xf32> to vector<2x96xf32>
    %cst_18 = arith.constant dense<0.000000e+00> : vector<2x96xf32>
    %35 = tpu.matmul %32, %2, %cst_18 {dimension_numbers = #tpu.dot_dimension_numbers<[1], [0], [0], [1], [0, 0, 1, 1], [], []>} : vector<2x32xf32>, vector<32x96xf32>, vector<2x96xf32> -> vector<2x96xf32>
    %36 = vector.extract_strided_slice %34 {offsets = [0, 0], sizes = [2, 64], strides = [1, 1]} : vector<2x96xf32> to vector<2x64xf32>
    %37 = vector.extract_strided_slice %35 {offsets = [0, 0], sizes = [2, 64], strides = [1, 1]} : vector<2x96xf32> to vector<2x64xf32>
    %38 = arith.addf %36, %37 : vector<2x64xf32>
    %39 = arith.negf %38 : vector<2x64xf32>
    %40 = math.exp %39 : vector<2x64xf32>
    %cst_19 = arith.constant 1.000000e+00 : f32
    %41 = vector.broadcast %cst_19 : f32 to vector<2x64xf32>
    %42 = arith.addf %41, %40 : vector<2x64xf32>
    %43 = arith.divf %41, %42 : vector<2x64xf32>
    %44 = vector.extract_strided_slice %43 {offsets = [0, 0], sizes = [2, 32], strides = [1, 1]} : vector<2x64xf32> to vector<2x32xf32>
    %45 = vector.extract_strided_slice %43 {offsets = [0, 32], sizes = [2, 32], strides = [1, 1]} : vector<2x64xf32> to vector<2x32xf32>
    %46 = vector.extract_strided_slice %34 {offsets = [0, 64], sizes = [2, 32], strides = [1, 1]} : vector<2x96xf32> to vector<2x32xf32>
    %47 = vector.extract_strided_slice %35 {offsets = [0, 64], sizes = [2, 32], strides = [1, 1]} : vector<2x96xf32> to vector<2x32xf32>
    %48 = vector.broadcast %3 : vector<1x32xf32> to vector<2x32xf32>
    %49 = arith.addf %47, %48 : vector<2x32xf32>
    %50 = arith.mulf %44, %49 : vector<2x32xf32>
    %51 = arith.addf %46, %50 : vector<2x32xf32>
    %52 = math.tanh %51 : vector<2x32xf32>
    %53 = arith.subf %32, %52 : vector<2x32xf32>
    %54 = arith.mulf %45, %53 : vector<2x32xf32>
    %55 = arith.addf %52, %54 : vector<2x32xf32>
    %c2 = arith.constant 2 : index
    %c0_20 = arith.constant 0 : index
    %56 = vector.load %arg8[%c2, %c0_20] : memref<16x32xf32, #tpu.memory_space<vmem>>, vector<2x32xf32>
    tpu.vector_store %arg8[%c2, %c0_20], %55 {strides = array<i32>} : memref<16x32xf32, #tpu.memory_space<vmem>>, vector<2x32xf32>,
    %57 = vector.extract_strided_slice %9 {offsets = [4, 0], sizes = [2, 96], strides = [1, 1]} : vector<16x96xf32> to vector<2x96xf32>
    %cst_21 = arith.constant dense<0.000000e+00> : vector<2x96xf32>
    %58 = tpu.matmul %55, %2, %cst_21 {dimension_numbers = #tpu.dot_dimension_numbers<[1], [0], [0], [1], [0, 0, 1, 1], [], []>} : vector<2x32xf32>, vector<32x96xf32>, vector<2x96xf32> -> vector<2x96xf32>
    %59 = vector.extract_strided_slice %57 {offsets = [0, 0], sizes = [2, 64], strides = [1, 1]} : vector<2x96xf32> to vector<2x64xf32>
    %60 = vector.extract_strided_slice %58 {offsets = [0, 0], sizes = [2, 64], strides = [1, 1]} : vector<2x96xf32> to vector<2x64xf32>
    %61 = arith.addf %59, %60 : vector<2x64xf32>
    %62 = arith.negf %61 : vector<2x64xf32>
    %63 = math.exp %62 : vector<2x64xf32>
    %cst_22 = arith.constant 1.000000e+00 : f32
    %64 = vector.broadcast %cst_22 : f32 to vector<2x64xf32>
    %65 = arith.addf %64, %63 : vector<2x64xf32>
    %66 = arith.divf %64, %65 : vector<2x64xf32>
    %67 = vector.extract_strided_slice %66 {offsets = [0, 0], sizes = [2, 32], strides = [1, 1]} : vector<2x64xf32> to vector<2x32xf32>
    %68 = vector.extract_strided_slice %66 {offsets = [0, 32], sizes = [2, 32], strides = [1, 1]} : vector<2x64xf32> to vector<2x32xf32>
    %69 = vector.extract_strided_slice %57 {offsets = [0, 64], sizes = [2, 32], strides = [1, 1]} : vector<2x96xf32> to vector<2x32xf32>
    %70 = vector.extract_strided_slice %58 {offsets = [0, 64], sizes = [2, 32], strides = [1, 1]} : vector<2x96xf32> to vector<2x32xf32>
    %71 = vector.broadcast %3 : vector<1x32xf32> to vector<2x32xf32>
    %72 = arith.addf %70, %71 : vector<2x32xf32>
    %73 = arith.mulf %67, %72 : vector<2x32xf32>
    %74 = arith.addf %69, %73 : vector<2x32xf32>
    %75 = math.tanh %74 : vector<2x32xf32>
    %76 = arith.subf %55, %75 : vector<2x32xf32>
    %77 = arith.mulf %68, %76 : vector<2x32xf32>
    %78 = arith.addf %75, %77 : vector<2x32xf32>
    %c4 = arith.constant 4 : index
    %c0_23 = arith.constant 0 : index
    %79 = vector.load %arg8[%c4, %c0_23] : memref<16x32xf32, #tpu.memory_space<vmem>>, vector<2x32xf32>
    tpu.vector_store %arg8[%c4, %c0_23], %78 {strides = array<i32>} : memref<16x32xf32, #tpu.memory_space<vmem>>, vector<2x32xf32>,
    %80 = vector.extract_strided_slice %9 {offsets = [6, 0], sizes = [2, 96], strides = [1, 1]} : vector<16x96xf32> to vector<2x96xf32>
    %cst_24 = arith.constant dense<0.000000e+00> : vector<2x96xf32>
    %81 = tpu.matmul %78, %2, %cst_24 {dimension_numbers = #tpu.dot_dimension_numbers<[1], [0], [0], [1], [0, 0, 1, 1], [], []>} : vector<2x32xf32>, vector<32x96xf32>, vector<2x96xf32> -> vector<2x96xf32>
    %82 = vector.extract_strided_slice %80 {offsets = [0, 0], sizes = [2, 64], strides = [1, 1]} : vector<2x96xf32> to vector<2x64xf32>
    %83 = vector.extract_strided_slice %81 {offsets = [0, 0], sizes = [2, 64], strides = [1, 1]} : vector<2x96xf32> to vector<2x64xf32>
    %84 = arith.addf %82, %83 : vector<2x64xf32>
    %85 = arith.negf %84 : vector<2x64xf32>
    %86 = math.exp %85 : vector<2x64xf32>
    %cst_25 = arith.constant 1.000000e+00 : f32
    %87 = vector.broadcast %cst_25 : f32 to vector<2x64xf32>
    %88 = arith.addf %87, %86 : vector<2x64xf32>
    %89 = arith.divf %87, %88 : vector<2x64xf32>
    %90 = vector.extract_strided_slice %89 {offsets = [0, 0], sizes = [2, 32], strides = [1, 1]} : vector<2x64xf32> to vector<2x32xf32>
    %91 = vector.extract_strided_slice %89 {offsets = [0, 32], sizes = [2, 32], strides = [1, 1]} : vector<2x64xf32> to vector<2x32xf32>
    %92 = vector.extract_strided_slice %80 {offsets = [0, 64], sizes = [2, 32], strides = [1, 1]} : vector<2x96xf32> to vector<2x32xf32>
    %93 = vector.extract_strided_slice %81 {offsets = [0, 64], sizes = [2, 32], strides = [1, 1]} : vector<2x96xf32> to vector<2x32xf32>
    %94 = vector.broadcast %3 : vector<1x32xf32> to vector<2x32xf32>
    %95 = arith.addf %93, %94 : vector<2x32xf32>
    %96 = arith.mulf %90, %95 : vector<2x32xf32>
    %97 = arith.addf %92, %96 : vector<2x32xf32>
    %98 = math.tanh %97 : vector<2x32xf32>
    %99 = arith.subf %78, %98 : vector<2x32xf32>
    %100 = arith.mulf %91, %99 : vector<2x32xf32>
    %101 = arith.addf %98, %100 : vector<2x32xf32>
    %c6 = arith.constant 6 : index
    %c0_26 = arith.constant 0 : index
    %102 = vector.load %arg8[%c6, %c0_26] : memref<16x32xf32, #tpu.memory_space<vmem>>, vector<2x32xf32>
    tpu.vector_store %arg8[%c6, %c0_26], %101 {strides = array<i32>} : memref<16x32xf32, #tpu.memory_space<vmem>>, vector<2x32xf32>,
    %103 = vector.extract_strided_slice %9 {offsets = [8, 0], sizes = [2, 96], strides = [1, 1]} : vector<16x96xf32> to vector<2x96xf32>
    %cst_27 = arith.constant dense<0.000000e+00> : vector<2x96xf32>
    %104 = tpu.matmul %101, %2, %cst_27 {dimension_numbers = #tpu.dot_dimension_numbers<[1], [0], [0], [1], [0, 0, 1, 1], [], []>} : vector<2x32xf32>, vector<32x96xf32>, vector<2x96xf32> -> vector<2x96xf32>
    %105 = vector.extract_strided_slice %103 {offsets = [0, 0], sizes = [2, 64], strides = [1, 1]} : vector<2x96xf32> to vector<2x64xf32>
    %106 = vector.extract_strided_slice %104 {offsets = [0, 0], sizes = [2, 64], strides = [1, 1]} : vector<2x96xf32> to vector<2x64xf32>
    %107 = arith.addf %105, %106 : vector<2x64xf32>
    %108 = arith.negf %107 : vector<2x64xf32>
    %109 = math.exp %108 : vector<2x64xf32>
    %cst_28 = arith.constant 1.000000e+00 : f32
    %110 = vector.broadcast %cst_28 : f32 to vector<2x64xf32>
    %111 = arith.addf %110, %109 : vector<2x64xf32>
    %112 = arith.divf %110, %111 : vector<2x64xf32>
    %113 = vector.extract_strided_slice %112 {offsets = [0, 0], sizes = [2, 32], strides = [1, 1]} : vector<2x64xf32> to vector<2x32xf32>
    %114 = vector.extract_strided_slice %112 {offsets = [0, 32], sizes = [2, 32], strides = [1, 1]} : vector<2x64xf32> to vector<2x32xf32>
    %115 = vector.extract_strided_slice %103 {offsets = [0, 64], sizes = [2, 32], strides = [1, 1]} : vector<2x96xf32> to vector<2x32xf32>
    %116 = vector.extract_strided_slice %104 {offsets = [0, 64], sizes = [2, 32], strides = [1, 1]} : vector<2x96xf32> to vector<2x32xf32>
    %117 = vector.broadcast %3 : vector<1x32xf32> to vector<2x32xf32>
    %118 = arith.addf %116, %117 : vector<2x32xf32>
    %119 = arith.mulf %113, %118 : vector<2x32xf32>
    %120 = arith.addf %115, %119 : vector<2x32xf32>
    %121 = math.tanh %120 : vector<2x32xf32>
    %122 = arith.subf %101, %121 : vector<2x32xf32>
    %123 = arith.mulf %114, %122 : vector<2x32xf32>
    %124 = arith.addf %121, %123 : vector<2x32xf32>
    %c8 = arith.constant 8 : index
    %c0_29 = arith.constant 0 : index
    %125 = vector.load %arg8[%c8, %c0_29] : memref<16x32xf32, #tpu.memory_space<vmem>>, vector<2x32xf32>
    tpu.vector_store %arg8[%c8, %c0_29], %124 {strides = array<i32>} : memref<16x32xf32, #tpu.memory_space<vmem>>, vector<2x32xf32>,
    %126 = vector.extract_strided_slice %9 {offsets = [10, 0], sizes = [2, 96], strides = [1, 1]} : vector<16x96xf32> to vector<2x96xf32>
    %cst_30 = arith.constant dense<0.000000e+00> : vector<2x96xf32>
    %127 = tpu.matmul %124, %2, %cst_30 {dimension_numbers = #tpu.dot_dimension_numbers<[1], [0], [0], [1], [0, 0, 1, 1], [], []>} : vector<2x32xf32>, vector<32x96xf32>, vector<2x96xf32> -> vector<2x96xf32>
    %128 = vector.extract_strided_slice %126 {offsets = [0, 0], sizes = [2, 64], strides = [1, 1]} : vector<2x96xf32> to vector<2x64xf32>
    %129 = vector.extract_strided_slice %127 {offsets = [0, 0], sizes = [2, 64], strides = [1, 1]} : vector<2x96xf32> to vector<2x64xf32>
    %130 = arith.addf %128, %129 : vector<2x64xf32>
    %131 = arith.negf %130 : vector<2x64xf32>
    %132 = math.exp %131 : vector<2x64xf32>
    %cst_31 = arith.constant 1.000000e+00 : f32
    %133 = vector.broadcast %cst_31 : f32 to vector<2x64xf32>
    %134 = arith.addf %133, %132 : vector<2x64xf32>
    %135 = arith.divf %133, %134 : vector<2x64xf32>
    %136 = vector.extract_strided_slice %135 {offsets = [0, 0], sizes = [2, 32], strides = [1, 1]} : vector<2x64xf32> to vector<2x32xf32>
    %137 = vector.extract_strided_slice %135 {offsets = [0, 32], sizes = [2, 32], strides = [1, 1]} : vector<2x64xf32> to vector<2x32xf32>
    %138 = vector.extract_strided_slice %126 {offsets = [0, 64], sizes = [2, 32], strides = [1, 1]} : vector<2x96xf32> to vector<2x32xf32>
    %139 = vector.extract_strided_slice %127 {offsets = [0, 64], sizes = [2, 32], strides = [1, 1]} : vector<2x96xf32> to vector<2x32xf32>
    %140 = vector.broadcast %3 : vector<1x32xf32> to vector<2x32xf32>
    %141 = arith.addf %139, %140 : vector<2x32xf32>
    %142 = arith.mulf %136, %141 : vector<2x32xf32>
    %143 = arith.addf %138, %142 : vector<2x32xf32>
    %144 = math.tanh %143 : vector<2x32xf32>
    %145 = arith.subf %124, %144 : vector<2x32xf32>
    %146 = arith.mulf %137, %145 : vector<2x32xf32>
    %147 = arith.addf %144, %146 : vector<2x32xf32>
    %c10 = arith.constant 10 : index
    %c0_32 = arith.constant 0 : index
    %148 = vector.load %arg8[%c10, %c0_32] : memref<16x32xf32, #tpu.memory_space<vmem>>, vector<2x32xf32>
    tpu.vector_store %arg8[%c10, %c0_32], %147 {strides = array<i32>} : memref<16x32xf32, #tpu.memory_space<vmem>>, vector<2x32xf32>,
    %149 = vector.extract_strided_slice %9 {offsets = [12, 0], sizes = [2, 96], strides = [1, 1]} : vector<16x96xf32> to vector<2x96xf32>
    %cst_33 = arith.constant dense<0.000000e+00> : vector<2x96xf32>
    %150 = tpu.matmul %147, %2, %cst_33 {dimension_numbers = #tpu.dot_dimension_numbers<[1], [0], [0], [1], [0, 0, 1, 1], [], []>} : vector<2x32xf32>, vector<32x96xf32>, vector<2x96xf32> -> vector<2x96xf32>
    %151 = vector.extract_strided_slice %149 {offsets = [0, 0], sizes = [2, 64], strides = [1, 1]} : vector<2x96xf32> to vector<2x64xf32>
    %152 = vector.extract_strided_slice %150 {offsets = [0, 0], sizes = [2, 64], strides = [1, 1]} : vector<2x96xf32> to vector<2x64xf32>
    %153 = arith.addf %151, %152 : vector<2x64xf32>
    %154 = arith.negf %153 : vector<2x64xf32>
    %155 = math.exp %154 : vector<2x64xf32>
    %cst_34 = arith.constant 1.000000e+00 : f32
    %156 = vector.broadcast %cst_34 : f32 to vector<2x64xf32>
    %157 = arith.addf %156, %155 : vector<2x64xf32>
    %158 = arith.divf %156, %157 : vector<2x64xf32>
    %159 = vector.extract_strided_slice %158 {offsets = [0, 0], sizes = [2, 32], strides = [1, 1]} : vector<2x64xf32> to vector<2x32xf32>
    %160 = vector.extract_strided_slice %158 {offsets = [0, 32], sizes = [2, 32], strides = [1, 1]} : vector<2x64xf32> to vector<2x32xf32>
    %161 = vector.extract_strided_slice %149 {offsets = [0, 64], sizes = [2, 32], strides = [1, 1]} : vector<2x96xf32> to vector<2x32xf32>
    %162 = vector.extract_strided_slice %150 {offsets = [0, 64], sizes = [2, 32], strides = [1, 1]} : vector<2x96xf32> to vector<2x32xf32>
    %163 = vector.broadcast %3 : vector<1x32xf32> to vector<2x32xf32>
    %164 = arith.addf %162, %163 : vector<2x32xf32>
    %165 = arith.mulf %159, %164 : vector<2x32xf32>
    %166 = arith.addf %161, %165 : vector<2x32xf32>
    %167 = math.tanh %166 : vector<2x32xf32>
    %168 = arith.subf %147, %167 : vector<2x32xf32>
    %169 = arith.mulf %160, %168 : vector<2x32xf32>
    %170 = arith.addf %167, %169 : vector<2x32xf32>
    %c12 = arith.constant 12 : index
    %c0_35 = arith.constant 0 : index
    %171 = vector.load %arg8[%c12, %c0_35] : memref<16x32xf32, #tpu.memory_space<vmem>>, vector<2x32xf32>
    tpu.vector_store %arg8[%c12, %c0_35], %170 {strides = array<i32>} : memref<16x32xf32, #tpu.memory_space<vmem>>, vector<2x32xf32>,
    %172 = vector.extract_strided_slice %9 {offsets = [14, 0], sizes = [2, 96], strides = [1, 1]} : vector<16x96xf32> to vector<2x96xf32>
    %cst_36 = arith.constant dense<0.000000e+00> : vector<2x96xf32>
    %173 = tpu.matmul %170, %2, %cst_36 {dimension_numbers = #tpu.dot_dimension_numbers<[1], [0], [0], [1], [0, 0, 1, 1], [], []>} : vector<2x32xf32>, vector<32x96xf32>, vector<2x96xf32> -> vector<2x96xf32>
    %174 = vector.extract_strided_slice %172 {offsets = [0, 0], sizes = [2, 64], strides = [1, 1]} : vector<2x96xf32> to vector<2x64xf32>
    %175 = vector.extract_strided_slice %173 {offsets = [0, 0], sizes = [2, 64], strides = [1, 1]} : vector<2x96xf32> to vector<2x64xf32>
    %176 = arith.addf %174, %175 : vector<2x64xf32>
    %177 = arith.negf %176 : vector<2x64xf32>
    %178 = math.exp %177 : vector<2x64xf32>
    %cst_37 = arith.constant 1.000000e+00 : f32
    %179 = vector.broadcast %cst_37 : f32 to vector<2x64xf32>
    %180 = arith.addf %179, %178 : vector<2x64xf32>
    %181 = arith.divf %179, %180 : vector<2x64xf32>
    %182 = vector.extract_strided_slice %181 {offsets = [0, 0], sizes = [2, 32], strides = [1, 1]} : vector<2x64xf32> to vector<2x32xf32>
    %183 = vector.extract_strided_slice %181 {offsets = [0, 32], sizes = [2, 32], strides = [1, 1]} : vector<2x64xf32> to vector<2x32xf32>
    %184 = vector.extract_strided_slice %172 {offsets = [0, 64], sizes = [2, 32], strides = [1, 1]} : vector<2x96xf32> to vector<2x32xf32>
    %185 = vector.extract_strided_slice %173 {offsets = [0, 64], sizes = [2, 32], strides = [1, 1]} : vector<2x96xf32> to vector<2x32xf32>
    %186 = vector.broadcast %3 : vector<1x32xf32> to vector<2x32xf32>
    %187 = arith.addf %185, %186 : vector<2x32xf32>
    %188 = arith.mulf %182, %187 : vector<2x32xf32>
    %189 = arith.addf %184, %188 : vector<2x32xf32>
    %190 = math.tanh %189 : vector<2x32xf32>
    %191 = arith.subf %170, %190 : vector<2x32xf32>
    %192 = arith.mulf %183, %191 : vector<2x32xf32>
    %193 = arith.addf %190, %192 : vector<2x32xf32>
    %c14 = arith.constant 14 : index
    %c0_38 = arith.constant 0 : index
    %194 = vector.load %arg8[%c14, %c0_38] : memref<16x32xf32, #tpu.memory_space<vmem>>, vector<2x32xf32>
    tpu.vector_store %arg8[%c14, %c0_38], %193 {strides = array<i32>} : memref<16x32xf32, #tpu.memory_space<vmem>>, vector<2x32xf32>,
    %c0_39 = arith.constant 0 : index
    %c0_40 = arith.constant 0 : index
    %195 = vector.load %arg8[%c0_39, %c0_40] : memref<16x32xf32, #tpu.memory_space<vmem>>, vector<16x32xf32>
    %cst_41 = arith.constant dense<0.000000e+00> : vector<16x4xf32>
    %196 = tpu.matmul %195, %4, %cst_41 {dimension_numbers = #tpu.dot_dimension_numbers<[1], [0], [0], [1], [0, 0, 1, 1], [], []>} : vector<16x32xf32>, vector<32x4xf32>, vector<16x4xf32> -> vector<16x4xf32>
    %197 = vector.broadcast %5 : vector<1x4xf32> to vector<16x4xf32>
    %198 = arith.addf %196, %197 : vector<16x4xf32>
    %c0_42 = arith.constant 0 : index
    %c0_43 = arith.constant 0 : index
    %199 = vector.load %arg7[%c0_42, %c0_43] : memref<16x4xf32, #tpu.memory_space<vmem>>, vector<16x4xf32>
    tpu.vector_store %arg7[%c0_42, %c0_43], %198 {strides = array<i32>} : memref<16x4xf32, #tpu.memory_space<vmem>>, vector<16x4xf32>,
    return
  }
}

</mosaic_0001>

<llo_original>
// kernel: tpu_custom_call.1
$region0: #{tpu_custom_call.1}
  #allocation0 [shape = 'u32[]', space=smem, size = 0x4, offset = 0x4, fixed_abs, tag = 'smem constant byte address 0x4 - core index']
  #allocation1 [shape = 'u32[144,128]{1,0:T(1,128)}', space=vmem, size = 0x12000, scoped, tag = 'internal scratch']
  #allocation2 [shape = 'f32[16,32]{1,0:T(8,128)}', space=vmem, size = 0x2000, scoped, tag = 'scratch operand']
  %s0 = inlined_call_operand.vmem [shape: f32[16,8], index: 0, kind: input, shape index: {}]
  %s1 = inlined_call_operand.vmem [shape: f32[8,96], index: 1, kind: input, shape index: {}]
  %s2 = inlined_call_operand.vmem [shape: f32[1,96], index: 2, kind: input, shape index: {}]
  %s3 = inlined_call_operand.vmem [shape: f32[32,96], index: 3, kind: input, shape index: {}]
  %s4 = inlined_call_operand.vmem [shape: f32[1,32], index: 4, kind: input, shape index: {}]
  %s5 = inlined_call_operand.vmem [shape: f32[32,4], index: 5, kind: input, shape index: {}]
  %s6 = inlined_call_operand.vmem [shape: f32[1,4], index: 6, kind: input, shape index: {}]
  %s7 = inlined_call_operand.vmem [shape: f32[16,4], index: 7, kind: output, shape index: {}]
  %s8 = sld [smem:[#allocation0]]
  $region38: #{tpu_custom_call.1} parent=0
    _
  %s10 = ssub.s32 1, %s8
  %s11 = scalar_select 0, %s10, %s8
  // Predicated region
  $region2: #{tpu_custom_call.1} parent=0 // pred_check
    _
  $region3: #{tpu_custom_call.1} parent=0 // pred_check_branch
    %13 = sbr.rel (0) target = $region5
  $region4: #{tpu_custom_call.1} parent=0 // pred_region
    _
  $region5: #{tpu_custom_call.1} parent=0 // pred_fallthru
    _
  // Predicated region
  $region6: #{tpu_custom_call.1} parent=0 // pred_check
    _
  $region7: #{tpu_custom_call.1} parent=0 // pred_check_branch
    %15 = sbr.rel (0) target = $region9
  $region8: #{tpu_custom_call.1} parent=0 // pred_region
    _
  $region9: #{tpu_custom_call.1} parent=0 // pred_fallthru
    _
  // Predicated region
  $region10: #{tpu_custom_call.1} parent=0 // pred_check
    _
  $region11: #{tpu_custom_call.1} parent=0 // pred_check_branch
    %17 = sbr.rel (0) target = $region13
  $region12: #{tpu_custom_call.1} parent=0 // pred_region
    _
  $region13: #{tpu_custom_call.1} parent=0 // pred_fallthru
    _
  // Predicated region
  $region14: #{tpu_custom_call.1} parent=0 // pred_check
    _
  $region15: #{tpu_custom_call.1} parent=0 // pred_check_branch
    %19 = sbr.rel (0) target = $region17
  $region16: #{tpu_custom_call.1} parent=0 // pred_region
    _
  $region17: #{tpu_custom_call.1} parent=0 // pred_fallthru
    _
  // Predicated region
  $region18: #{tpu_custom_call.1} parent=0 // pred_check
    _
  $region19: #{tpu_custom_call.1} parent=0 // pred_check_branch
    %21 = sbr.rel (0) target = $region21
  $region20: #{tpu_custom_call.1} parent=0 // pred_region
    _
  $region21: #{tpu_custom_call.1} parent=0 // pred_fallthru
    _
  // Predicated region
  $region22: #{tpu_custom_call.1} parent=0 // pred_check
    _
  $region23: #{tpu_custom_call.1} parent=0 // pred_check_branch
    %23 = sbr.rel (0) target = $region25
  $region24: #{tpu_custom_call.1} parent=0 // pred_region
    _
  $region25: #{tpu_custom_call.1} parent=0 // pred_fallthru
    _
  // Predicated region
  $region26: #{tpu_custom_call.1} parent=0 // pred_check
    _
  $region27: #{tpu_custom_call.1} parent=0 // pred_check_branch
    %25 = sbr.rel (0) target = $region29
  $region28: #{tpu_custom_call.1} parent=0 // pred_region
    _
  $region29: #{tpu_custom_call.1} parent=0 // pred_fallthru
    _
  %v26 = vld [vmem:[%s1] sm:$0xff]
  %v27 = vld [vmem:[%s2] sm:$0x1]
  %v28 = vld [vmem:[%s3] sm:$0xff]
  %v29 = vld [vmem:[%s3 + $0x8] sm:$0xff]
  %v30 = vld [vmem:[%s3 + $0x10] sm:$0xff]
  %v31 = vld [vmem:[%s3 + $0x18] sm:$0xff]
  %v32 = vld [vmem:[%s4] sm:$0x1]
  %v33 = vld [vmem:[%s5] sm:$0xff]
  %v34 = vld [vmem:[%s5 + $0x8] sm:$0xff]
  %v35 = vld [vmem:[%s5 + $0x10] sm:$0xff]
  %v36 = vld [vmem:[%s5 + $0x18] sm:$0xff]
  %v37 = vld [vmem:[%s6] sm:$0x1]
  %v38 = vld [vmem:[%s0] sm:$0xff]
  %v39 = vld [vmem:[%s0 + $0x8] sm:$0xff]
  %v41 = vlaneseq
  %v42 = vshrl.u32 %v41, 7
  %v43 = vsub.s32 0, %v42
  %v44 = vrot.slane %v27, %v43
  %vm46 = vcmask 64512
  %v48 = vsel %vm46, %v38, 0
  %v51 = vsel %vm46, %v39, 0
  %53 = vmatprep.subr.mxu0 0.0
  %54 = vmatpush1.msra.mxu0 0.0
  %55 = vmatprep.subr.mxu0 0.0
  %56 = vmatpush1.msra.mxu0 0.0
  %57 = vmatprep.subr.mxu0 0.0
  %58 = vmatpush1.msra.mxu0 0.0
  %59 = vmatprep.subr.mxu0 0.0
  %60 = vmatpush1.msra.mxu0 0.0
  %61 = vmatprep.subr.mxu0 0.0
  %62 = vmatpush1.msra.mxu0 0.0
  %63 = vmatprep.subr.mxu0 0.0
  %64 = vmatpush1.msra.mxu0 0.0
  %65 = vmatprep.subr.mxu0 0.0
  %66 = vmatpush1.msra.mxu0 0.0
  %67 = vmatprep.subr.mxu0 0.0
  %68 = vmatpush1.msra.mxu0 0.0
  %69 = vmatprep.subr.mxu0 0.0
  %70 = vmatpush1.msra.mxu0 0.0
  %71 = vmatprep.subr.mxu0 0.0
  %72 = vmatpush1.msra.mxu0 0.0
  %73 = vmatprep.subr.mxu0 0.0
  %74 = vmatpush1.msra.mxu0 0.0
  %75 = vmatprep.subr.mxu0 0.0
  %76 = vmatpush1.msra.mxu0 0.0
  %77 = vmatprep.subr.mxu0 0.0
  %78 = vmatpush1.msra.mxu0 0.0
  %79 = vmatprep.subr.mxu0 0.0
  %80 = vmatpush1.msra.mxu0 0.0
  %81 = vmatprep.subr.mxu0 0.0
  %82 = vmatpush1.msra.mxu0 0.0
  %83 = vmatprep.subr.mxu0 0.0
  %84 = vmatpush1.msra.mxu0 %v26
  %85 = vmatprep.subr.mxu0 0.0
  %86 = vmatpush2.msra.mxu0 0.0
  %87 = vmatprep.subr.mxu0 0.0
  %88 = vmatpush2.msra.mxu0 0.0
  %89 = vmatprep.subr.mxu0 0.0
  %90 = vmatpush2.msra.mxu0 0.0
  %91 = vmatprep.subr.mxu0 0.0
  %92 = vmatpush2.msra.mxu0 0.0
  %93 = vmatprep.subr.mxu0 0.0
  %94 = vmatpush2.msra.mxu0 0.0
  %95 = vmatprep.subr.mxu0 0.0
  %96 = vmatpush2.msra.mxu0 0.0
  %97 = vmatprep.subr.mxu0 0.0
  %98 = vmatpush2.msra.mxu0 0.0
  %99 = vmatprep.subr.mxu0 0.0
  %100 = vmatpush2.msra.mxu0 0.0
  %101 = vmatprep.subr.mxu0 0.0
  %102 = vmatpush2.msra.mxu0 0.0
  %103 = vmatprep.subr.mxu0 0.0
  %104 = vmatpush2.msra.mxu0 0.0
  %105 = vmatprep.subr.mxu0 0.0
  %106 = vmatpush2.msra.mxu0 0.0
  %107 = vmatprep.subr.mxu0 0.0
  %108 = vmatpush2.msra.mxu0 0.0
  %109 = vmatprep.subr.mxu0 0.0
  %110 = vmatpush2.msra.mxu0 0.0
  %111 = vmatprep.subr.mxu0 0.0
  %112 = vmatpush2.msra.mxu0 0.0
  %113 = vmatprep.subr.mxu0 0.0
  %114 = vmatpush2.msra.mxu0 0.0
  %115 = vmatprep.subr.mxu0 0.0
  %116 = vmatpush2.msra.mxu0 0.0
  %117 = vmatprep.mubr.f32.mxu0 0.0
  %118 = vmatmul.mubr.f32.gmra.mxu0 %v48
  %v119 = vpop.f32.mrf.mxu0
  %v120 = vadd.f32 %v44, %v119
  %v121 = vpop.f32.mrf.mxu0
  %122 = vmatprep.mubr.f32.mxu0 0.0
  %123 = vmatmul.mubr.f32.gmra.mxu0 %v51
  %v124 = vpop.f32.mrf.mxu0
  %v125 = vadd.f32 %v44, %v124
  %v126 = vpop.f32.mrf.mxu0
  %127 = vdwg.mxu0
  %vm128 = vcmask 261120
  %v130 = vsel %vm128, 0.0, 0
  %132 = vmatprep.subr.mxu0 0.0
  %133 = vmatpush1.msra.mxu0 0.0
  %134 = vmatprep.subr.mxu0 0.0
  %135 = vmatpush1.msra.mxu0 0.0
  %136 = vmatprep.subr.mxu0 0.0
  %137 = vmatpush1.msra.mxu0 0.0
  %138 = vmatprep.subr.mxu0 0.0
  %139 = vmatpush1.msra.mxu0 0.0
  %140 = vmatprep.subr.mxu0 0.0
  %141 = vmatpush1.msra.mxu0 0.0
  %142 = vmatprep.subr.mxu0 0.0
  %143 = vmatpush1.msra.mxu0 0.0
  %144 = vmatprep.subr.mxu0 0.0
  %145 = vmatpush1.msra.mxu0 0.0
  %146 = vmatprep.subr.mxu0 0.0
  %147 = vmatpush1.msra.mxu0 0.0
  %148 = vmatprep.subr.mxu0 0.0
  %149 = vmatpush1.msra.mxu0 0.0
  %150 = vmatprep.subr.mxu0 0.0
  %151 = vmatpush1.msra.mxu0 0.0
  %152 = vmatprep.subr.mxu0 0.0
  %153 = vmatpush1.msra.mxu0 0.0
  %154 = vmatprep.subr.mxu0 0.0
  %155 = vmatpush1.msra.mxu0 0.0
  %156 = vmatprep.subr.mxu0 0.0
  %157 = vmatpush1.msra.mxu0 %v31
  %158 = vmatprep.subr.mxu0 0.0
  %159 = vmatpush1.msra.mxu0 %v30
  %160 = vmatprep.subr.mxu0 0.0
  %161 = vmatpush1.msra.mxu0 %v29
  %162 = vmatprep.subr.mxu0 0.0
  %163 = vmatpush1.msra.mxu0 %v28
  %164 = vmatprep.subr.mxu0 0.0
  %165 = vmatpush2.msra.mxu0 0.0
  %166 = vmatprep.subr.mxu0 0.0
  %167 = vmatpush2.msra.mxu0 0.0
  %168 = vmatprep.subr.mxu0 0.0
  %169 = vmatpush2.msra.mxu0 0.0
  %170 = vmatprep.subr.mxu0 0.0
  %171 = vmatpush2.msra.mxu0 0.0
  %172 = vmatprep.subr.mxu0 0.0
  %173 = vmatpush2.msra.mxu0 0.0
  %174 = vmatprep.subr.mxu0 0.0
  %175 = vmatpush2.msra.mxu0 0.0
  %176 = vmatprep.subr.mxu0 0.0
  %177 = vmatpush2.msra.mxu0 0.0
  %178 = vmatprep.subr.mxu0 0.0
  %179 = vmatpush2.msra.mxu0 0.0
  %180 = vmatprep.subr.mxu0 0.0
  %181 = vmatpush2.msra.mxu0 0.0
  %182 = vmatprep.subr.mxu0 0.0
  %183 = vmatpush2.msra.mxu0 0.0
  %184 = vmatprep.subr.mxu0 0.0
  %185 = vmatpush2.msra.mxu0 0.0
  %186 = vmatprep.subr.mxu0 0.0
  %187 = vmatpush2.msra.mxu0 0.0
  %188 = vmatprep.subr.mxu0 0.0
  %189 = vmatpush2.msra.mxu0 0.0
  %190 = vmatprep.subr.mxu0 0.0
  %191 = vmatpush2.msra.mxu0 0.0
  %192 = vmatprep.subr.mxu0 0.0
  %193 = vmatpush2.msra.mxu0 0.0
  %194 = vmatprep.subr.mxu0 0.0
  %195 = vmatpush2.msra.mxu0 0.0
  %196 = vmatprep.mubr.f32.mxu0 0.0
  %197 = vmatmul.mubr.f32.gmra.mxu0 %v130
  %v198 = vpop.f32.mrf.mxu0
  %v199 = vadd.f32 0.0, %v198
  %v200 = vpop.f32.mrf.mxu0
  %201 = vdwg.mxu0
  %v202 = vadd.f32 %v120, %v199
  %v203 = vxor.u32 %v202, 2147483648
  %v204 = vmul.f32 %v203, 1.442695
  %v205 = vpow.pop %v204
  %v206 = vadd.f32 %v205, 1.0
  %v207 = vrcp.pop %v206
  %v208 = vmul.f32 1.0, %v207
  %v210 = vlaneseq
  %v211 = vshrl.u32 %v210, 7
  %v212 = vsub.s32 0, %v211
  %v213 = vrot.slane %v32, %v212
  %214 = vrot.lane.b32.xlu0 %v213, 64
  %v215 = vpop.permute.xlu0 %214
  %v217 = vadd.f32 %v199, %v215
  %219 = vrot.lane.b32.xlu0 %v217, 64
  %v220 = vpop.permute.xlu0 %219
  %v222 = vmul.f32 %v208, %v220
  %224 = vrot.lane.b32.xlu0 %v222, 64
  %v225 = vpop.permute.xlu0 %224
  %v227 = vadd.f32 %v120, %v225
  %v228 = vtanh.pop %v227
  %v229 = vsub.f32 0.0, %v228
  %231 = vrot.lane.b32.xlu0 %v229, 96
  %v232 = vpop.permute.xlu0 %231
  %v234 = vmul.f32 %v208, %v232
  %236 = vrot.lane.b32.xlu0 %v234, 32
  %v237 = vpop.permute.xlu0 %236
  %v239 = vadd.f32 %v228, %v237
  %241 = vrot.lane.b32.xlu0 %v239, 64
  %v242 = vpop.permute.xlu0 %241
  %vm244 = vcmask 254976
  %245 = vst.msk [vmem:[#allocation2] sm:$0x3] %vm244, %v242
  %v246 = vsel %vm128, %v242, 0
  %248 = vmatprep.subr.mxu0 0.0
  %249 = vmatpush1.msra.mxu0 0.0
  %250 = vmatprep.subr.mxu0 0.0
  %251 = vmatpush1.msra.mxu0 0.0
  %252 = vmatprep.subr.mxu0 0.0
  %253 = vmatpush1.msra.mxu0 0.0
  %254 = vmatprep.subr.mxu0 0.0
  %255 = vmatpush1.msra.mxu0 0.0
  %256 = vmatprep.subr.mxu0 0.0
  %257 = vmatpush1.msra.mxu0 0.0
  %258 = vmatprep.subr.mxu0 0.0
  %259 = vmatpush1.msra.mxu0 0.0
  %260 = vmatprep.subr.mxu0 0.0
  %261 = vmatpush1.msra.mxu0 0.0
  %262 = vmatprep.subr.mxu0 0.0
  %263 = vmatpush1.msra.mxu0 0.0
  %264 = vmatprep.subr.mxu0 0.0
  %265 = vmatpush1.msra.mxu0 0.0
  %266 = vmatprep.subr.mxu0 0.0
  %267 = vmatpush1.msra.mxu0 0.0
  %268 = vmatprep.subr.mxu0 0.0
  %269 = vmatpush1.msra.mxu0 0.0
  %270 = vmatprep.subr.mxu0 0.0
  %271 = vmatpush1.msra.mxu0 0.0
  %272 = vmatprep.subr.mxu0 0.0
  %273 = vmatpush1.msra.mxu0 %v31
  %274 = vmatprep.subr.mxu0 0.0
  %275 = vmatpush1.msra.mxu0 %v30
  %276 = vmatprep.subr.mxu0 0.0
  %277 = vmatpush1.msra.mxu0 %v29
  %278 = vmatprep.subr.mxu0 0.0
  %279 = vmatpush1.msra.mxu0 %v28
  %280 = vmatprep.subr.mxu0 0.0
  %281 = vmatpush2.msra.mxu0 0.0
  %282 = vmatprep.subr.mxu0 0.0
  %283 = vmatpush2.msra.mxu0 0.0
  %284 = vmatprep.subr.mxu0 0.0
  %285 = vmatpush2.msra.mxu0 0.0
  %286 = vmatprep.subr.mxu0 0.0
  %287 = vmatpush2.msra.mxu0 0.0
  %288 = vmatprep.subr.mxu0 0.0
  %289 = vmatpush2.msra.mxu0 0.0
  %290 = vmatprep.subr.mxu0 0.0
  %291 = vmatpush2.msra.mxu0 0.0
  %292 = vmatprep.subr.mxu0 0.0
  %293 = vmatpush2.msra.mxu0 0.0
  %294 = vmatprep.subr.mxu0 0.0
  %295 = vmatpush2.msra.mxu0 0.0
  %296 = vmatprep.subr.mxu0 0.0
  %297 = vmatpush2.msra.mxu0 0.0
  %298 = vmatprep.subr.mxu0 0.0
  %299 = vmatpush2.msra.mxu0 0.0
  %300 = vmatprep.subr.mxu0 0.0
  %301 = vmatpush2.msra.mxu0 0.0
  %302 = vmatprep.subr.mxu0 0.0
  %303 = vmatpush2.msra.mxu0 0.0
  %304 = vmatprep.subr.mxu0 0.0
  %305 = vmatpush2.msra.mxu0 0.0
  %306 = vmatprep.subr.mxu0 0.0
  %307 = vmatpush2.msra.mxu0 0.0
  %308 = vmatprep.subr.mxu0 0.0
  %309 = vmatpush2.msra.mxu0 0.0
  %310 = vmatprep.subr.mxu0 0.0
  %311 = vmatpush2.msra.mxu0 0.0
  %312 = vmatprep.mubr.f32.mxu0 0.0
  %313 = vmatmul.mubr.f32.gmra.mxu0 %v246
  %v314 = vpop.f32.mrf.mxu0
  %v315 = vadd.f32 0.0, %v314
  %v316 = vpop.f32.mrf.mxu0
  %317 = vdwg.mxu0
  %v319 = vrot.slane %v315, 6
  %v321 = vadd.f32 %v120, %v319
  %v322 = vxor.u32 %v321, 2147483648
  %v323 = vmul.f32 %v322, 1.442695
  %v324 = vpow.pop %v323
  %v325 = vadd.f32 %v324, 1.0
  %v326 = vrcp.pop %v325
  %v327 = vmul.f32 1.0, %v326
  %v328 = vadd.f32 %v315, %v215
  %v330 = vrot.slane %v328, 6
  %331 = vrot.lane.b32.xlu0 %v330, 64
  %v332 = vpop.permute.xlu0 %331
  %v334 = vmul.f32 %v327, %v332
  %336 = vrot.lane.b32.xlu0 %v334, 64
  %v337 = vpop.permute.xlu0 %336
  %v339 = vadd.f32 %v120, %v337
  %v340 = vtanh.pop %v339
  %v342 = vrot.slane %v340, 2
  %v344 = vsub.f32 %v239, %v342
  %v346 = vrot.slane %v344, 6
  %347 = vrot.lane.b32.xlu0 %v346, 96
  %v348 = vpop.permute.xlu0 %347
  %v350 = vmul.f32 %v327, %v348
  %352 = vrot.lane.b32.xlu0 %v350, 32
  %v353 = vpop.permute.xlu0 %352
  %v355 = vadd.f32 %v340, %v353
  %357 = vrot.lane.b32.xlu0 %v355, 64
  %v358 = vpop.permute.xlu0 %357
  %vm360 = vcmask 257026
  %361 = vst.msk [vmem:[#allocation2] sm:$0xc] %vm360, %v358
  %v362 = vrot.slane %v355, 2
  %363 = vrot.lane.b32.xlu0 %v362, 64
  %v364 = vpop.permute.xlu0 %363
  %v365 = vsel %vm128, %v364, 0
  %367 = vmatprep.subr.mxu0 0.0
  %368 = vmatpush1.msra.mxu0 0.0
  %369 = vmatprep.subr.mxu0 0.0
  %370 = vmatpush1.msra.mxu0 0.0
  %371 = vmatprep.subr.mxu0 0.0
  %372 = vmatpush1.msra.mxu0 0.0
  %373 = vmatprep.subr.mxu0 0.0
  %374 = vmatpush1.msra.mxu0 0.0
  %375 = vmatprep.subr.mxu0 0.0
  %376 = vmatpush1.msra.mxu0 0.0
  %377 = vmatprep.subr.mxu0 0.0
  %378 = vmatpush1.msra.mxu0 0.0
  %379 = vmatprep.subr.mxu0 0.0
  %380 = vmatpush1.msra.mxu0 0.0
  %381 = vmatprep.subr.mxu0 0.0
  %382 = vmatpush1.msra.mxu0 0.0
  %383 = vmatprep.subr.mxu0 0.0
  %384 = vmatpush1.msra.mxu0 0.0
  %385 = vmatprep.subr.mxu0 0.0
  %386 = vmatpush1.msra.mxu0 0.0
  %387 = vmatprep.subr.mxu0 0.0
  %388 = vmatpush1.msra.mxu0 0.0
  %389 = vmatprep.subr.mxu0 0.0
  %390 = vmatpush1.msra.mxu0 0.0
  %391 = vmatprep.subr.mxu0 0.0
  %392 = vmatpush1.msra.mxu0 %v31
  %393 = vmatprep.subr.mxu0 0.0
  %394 = vmatpush1.msra.mxu0 %v30
  %395 = vmatprep.subr.mxu0 0.0
  %396 = vmatpush1.msra.mxu0 %v29
  %397 = vmatprep.subr.mxu0 0.0
  %398 = vmatpush1.msra.mxu0 %v28
  %399 = vmatprep.subr.mxu0 0.0
  %400 = vmatpush2.msra.mxu0 0.0
  %401 = vmatprep.subr.mxu0 0.0
  %402 = vmatpush2.msra.mxu0 0.0
  %403 = vmatprep.subr.mxu0 0.0
  %404 = vmatpush2.msra.mxu0 0.0
  %405 = vmatprep.subr.mxu0 0.0
  %406 = vmatpush2.msra.mxu0 0.0
  %407 = vmatprep.subr.mxu0 0.0
  %408 = vmatpush2.msra.mxu0 0.0
  %409 = vmatprep.subr.mxu0 0.0
  %410 = vmatpush2.msra.mxu0 0.0
  %411 = vmatprep.subr.mxu0 0.0
  %412 = vmatpush2.msra.mxu0 0.0
  %413 = vmatprep.subr.mxu0 0.0
  %414 = vmatpush2.msra.mxu0 0.0
  %415 = vmatprep.subr.mxu0 0.0
  %416 = vmatpush2.msra.mxu0 0.0
  %417 = vmatprep.subr.mxu0 0.0
  %418 = vmatpush2.msra.mxu0 0.0
  %419 = vmatprep.subr.mxu0 0.0
  %420 = vmatpush2.msra.mxu0 0.0
  %421 = vmatprep.subr.mxu0 0.0
  %422 = vmatpush2.msra.mxu0 0.0
  %423 = vmatprep.subr.mxu0 0.0
  %424 = vmatpush2.msra.mxu0 0.0
  %425 = vmatprep.subr.mxu0 0.0
  %426 = vmatpush2.msra.mxu0 0.0
  %427 = vmatprep.subr.mxu0 0.0
  %428 = vmatpush2.msra.mxu0 0.0
  %429 = vmatprep.subr.mxu0 0.0
  %430 = vmatpush2.msra.mxu0 0.0
  %431 = vmatprep.mubr.f32.mxu0 0.0
  %432 = vmatmul.mubr.f32.gmra.mxu0 %v365
  %v433 = vpop.f32.mrf.mxu0
  %v434 = vadd.f32 0.0, %v433
  %v435 = vpop.f32.mrf.mxu0
  %436 = vdwg.mxu0
  %v438 = vrot.slane %v434, 4
  %v440 = vadd.f32 %v120, %v438
  %v441 = vxor.u32 %v440, 2147483648
  %v442 = vmul.f32 %v441, 1.442695
  %v443 = vpow.pop %v442
  %v444 = vadd.f32 %v443, 1.0
  %v445 = vrcp.pop %v444
  %v446 = vmul.f32 1.0, %v445
  %v447 = vadd.f32 %v434, %v215
  %v449 = vrot.slane %v447, 4
  %450 = vrot.lane.b32.xlu0 %v449, 64
  %v451 = vpop.permute.xlu0 %450
  %v453 = vmul.f32 %v446, %v451
  %455 = vrot.lane.b32.xlu0 %v453, 64
  %v456 = vpop.permute.xlu0 %455
  %v458 = vadd.f32 %v120, %v456
  %v459 = vtanh.pop %v458
  %v461 = vrot.slane %v459, 2
  %v463 = vsub.f32 %v355, %v461
  %v465 = vrot.slane %v463, 6
  %466 = vrot.lane.b32.xlu0 %v465, 96
  %v467 = vpop.permute.xlu0 %466
  %v469 = vmul.f32 %v446, %v467
  %471 = vrot.lane.b32.xlu0 %v469, 32
  %v472 = vpop.permute.xlu0 %471
  %v474 = vadd.f32 %v459, %v472
  %476 = vrot.lane.b32.xlu0 %v474, 64
  %v477 = vpop.permute.xlu0 %476
  %vm479 = vcmask 259076
  %480 = vst.msk [vmem:[#allocation2] sm:$0x30] %vm479, %v477
  %v481 = vrot.slane %v474, 4
  %482 = vrot.lane.b32.xlu0 %v481, 64
  %v483 = vpop.permute.xlu0 %482
  %v484 = vsel %vm128, %v483, 0
  %486 = vmatprep.subr.mxu0 0.0
  %487 = vmatpush1.msra.mxu0 0.0
  %488 = vmatprep.subr.mxu0 0.0
  %489 = vmatpush1.msra.mxu0 0.0
  %490 = vmatprep.subr.mxu0 0.0
  %491 = vmatpush1.msra.mxu0 0.0
  %492 = vmatprep.subr.mxu0 0.0
  %493 = vmatpush1.msra.mxu0 0.0
  %494 = vmatprep.subr.mxu0 0.0
  %495 = vmatpush1.msra.mxu0 0.0
  %496 = vmatprep.subr.mxu0 0.0
  %497 = vmatpush1.msra.mxu0 0.0
  %498 = vmatprep.subr.mxu0 0.0
  %499 = vmatpush1.msra.mxu0 0.0
  %500 = vmatprep.subr.mxu0 0.0
  %501 = vmatpush1.msra.mxu0 0.0
  %502 = vmatprep.subr.mxu0 0.0
  %503 = vmatpush1.msra.mxu0 0.0
  %504 = vmatprep.subr.mxu0 0.0
  %505 = vmatpush1.msra.mxu0 0.0
  %506 = vmatprep.subr.mxu0 0.0
  %507 = vmatpush1.msra.mxu0 0.0
  %508 = vmatprep.subr.mxu0 0.0
  %509 = vmatpush1.msra.mxu0 0.0
  %510 = vmatprep.subr.mxu0 0.0
  %511 = vmatpush1.msra.mxu0 %v31
  %512 = vmatprep.subr.mxu0 0.0
  %513 = vmatpush1.msra.mxu0 %v30
  %514 = vmatprep.subr.mxu0 0.0
  %515 = vmatpush1.msra.mxu0 %v29
  %516 = vmatprep.subr.mxu0 0.0
  %517 = vmatpush1.msra.mxu0 %v28
  %518 = vmatprep.subr.mxu0 0.0
  %519 = vmatpush2.msra.mxu0 0.0
  %520 = vmatprep.subr.mxu0 0.0
  %521 = vmatpush2.msra.mxu0 0.0
  %522 = vmatprep.subr.mxu0 0.0
  %523 = vmatpush2.msra.mxu0 0.0
  %524 = vmatprep.subr.mxu0 0.0
  %525 = vmatpush2.msra.mxu0 0.0
  %526 = vmatprep.subr.mxu0 0.0
  %527 = vmatpush2.msra.mxu0 0.0
  %528 = vmatprep.subr.mxu0 0.0
  %529 = vmatpush2.msra.mxu0 0.0
  %530 = vmatprep.subr.mxu0 0.0
  %531 = vmatpush2.msra.mxu0 0.0
  %532 = vmatprep.subr.mxu0 0.0
  %533 = vmatpush2.msra.mxu0 0.0
  %534 = vmatprep.subr.mxu0 0.0
  %535 = vmatpush2.msra.mxu0 0.0
  %536 = vmatprep.subr.mxu0 0.0
  %537 = vmatpush2.msra.mxu0 0.0
  %538 = vmatprep.subr.mxu0 0.0
  %539 = vmatpush2.msra.mxu0 0.0
  %540 = vmatprep.subr.mxu0 0.0
  %541 = vmatpush2.msra.mxu0 0.0
  %542 = vmatprep.subr.mxu0 0.0
  %543 = vmatpush2.msra.mxu0 0.0
  %544 = vmatprep.subr.mxu0 0.0
  %545 = vmatpush2.msra.mxu0 0.0
  %546 = vmatprep.subr.mxu0 0.0
  %547 = vmatpush2.msra.mxu0 0.0
  %548 = vmatprep.subr.mxu0 0.0
  %549 = vmatpush2.msra.mxu0 0.0
  %550 = vmatprep.mubr.f32.mxu0 0.0
  %551 = vmatmul.mubr.f32.gmra.mxu0 %v484
  %v552 = vpop.f32.mrf.mxu0
  %v553 = vadd.f32 0.0, %v552
  %v554 = vpop.f32.mrf.mxu0
  %555 = vdwg.mxu0
  %v557 = vrot.slane %v553, 2
  %v559 = vadd.f32 %v120, %v557
  %v560 = vxor.u32 %v559, 2147483648
  %v561 = vmul.f32 %v560, 1.442695
  %v562 = vpow.pop %v561
  %v563 = vadd.f32 %v562, 1.0
  %v564 = vrcp.pop %v563
  %v565 = vmul.f32 1.0, %v564
  %v566 = vadd.f32 %v553, %v215
  %v568 = vrot.slane %v566, 2
  %569 = vrot.lane.b32.xlu0 %v568, 64
  %v570 = vpop.permute.xlu0 %569
  %v572 = vmul.f32 %v565, %v570
  %574 = vrot.lane.b32.xlu0 %v572, 64
  %v575 = vpop.permute.xlu0 %574
  %v577 = vadd.f32 %v120, %v575
  %v578 = vtanh.pop %v577
  %v580 = vrot.slane %v578, 2
  %v582 = vsub.f32 %v474, %v580
  %v584 = vrot.slane %v582, 6
  %585 = vrot.lane.b32.xlu0 %v584, 96
  %v586 = vpop.permute.xlu0 %585
  %v588 = vmul.f32 %v565, %v586
  %590 = vrot.lane.b32.xlu0 %v588, 32
  %v591 = vpop.permute.xlu0 %590
  %v593 = vadd.f32 %v578, %v591
  %595 = vrot.lane.b32.xlu0 %v593, 64
  %v596 = vpop.permute.xlu0 %595
  %vm598 = vcmask 261126
  %599 = vst.msk [vmem:[#allocation2] sm:$0xc0] %vm598, %v596
  %v600 = vrot.slane %v593, 6
  %601 = vrot.lane.b32.xlu0 %v600, 64
  %v602 = vpop.permute.xlu0 %601
  %v603 = vsel %vm128, %v602, 0
  %605 = vmatprep.subr.mxu0 0.0
  %606 = vmatpush1.msra.mxu0 0.0
  %607 = vmatprep.subr.mxu0 0.0
  %608 = vmatpush1.msra.mxu0 0.0
  %609 = vmatprep.subr.mxu0 0.0
  %610 = vmatpush1.msra.mxu0 0.0
  %611 = vmatprep.subr.mxu0 0.0
  %612 = vmatpush1.msra.mxu0 0.0
  %613 = vmatprep.subr.mxu0 0.0
  %614 = vmatpush1.msra.mxu0 0.0
  %615 = vmatprep.subr.mxu0 0.0
  %616 = vmatpush1.msra.mxu0 0.0
  %617 = vmatprep.subr.mxu0 0.0
  %618 = vmatpush1.msra.mxu0 0.0
  %619 = vmatprep.subr.mxu0 0.0
  %620 = vmatpush1.msra.mxu0 0.0
  %621 = vmatprep.subr.mxu0 0.0
  %622 = vmatpush1.msra.mxu0 0.0
  %623 = vmatprep.subr.mxu0 0.0
  %624 = vmatpush1.msra.mxu0 0.0
  %625 = vmatprep.subr.mxu0 0.0
  %626 = vmatpush1.msra.mxu0 0.0
  %627 = vmatprep.subr.mxu0 0.0
  %628 = vmatpush1.msra.mxu0 0.0
  %629 = vmatprep.subr.mxu0 0.0
  %630 = vmatpush1.msra.mxu0 %v31
  %631 = vmatprep.subr.mxu0 0.0
  %632 = vmatpush1.msra.mxu0 %v30
  %633 = vmatprep.subr.mxu0 0.0
  %634 = vmatpush1.msra.mxu0 %v29
  %635 = vmatprep.subr.mxu0 0.0
  %636 = vmatpush1.msra.mxu0 %v28
  %637 = vmatprep.subr.mxu0 0.0
  %638 = vmatpush2.msra.mxu0 0.0
  %639 = vmatprep.subr.mxu0 0.0
  %640 = vmatpush2.msra.mxu0 0.0
  %641 = vmatprep.subr.mxu0 0.0
  %642 = vmatpush2.msra.mxu0 0.0
  %643 = vmatprep.subr.mxu0 0.0
  %644 = vmatpush2.msra.mxu0 0.0
  %645 = vmatprep.subr.mxu0 0.0
  %646 = vmatpush2.msra.mxu0 0.0
  %647 = vmatprep.subr.mxu0 0.0
  %648 = vmatpush2.msra.mxu0 0.0
  %649 = vmatprep.subr.mxu0 0.0
  %650 = vmatpush2.msra.mxu0 0.0
  %651 = vmatprep.subr.mxu0 0.0
  %652 = vmatpush2.msra.mxu0 0.0
  %653 = vmatprep.subr.mxu0 0.0
  %654 = vmatpush2.msra.mxu0 0.0
  %655 = vmatprep.subr.mxu0 0.0
  %656 = vmatpush2.msra.mxu0 0.0
  %657 = vmatprep.subr.mxu0 0.0
  %658 = vmatpush2.msra.mxu0 0.0
  %659 = vmatprep.subr.mxu0 0.0
  %660 = vmatpush2.msra.mxu0 0.0
  %661 = vmatprep.subr.mxu0 0.0
  %662 = vmatpush2.msra.mxu0 0.0
  %663 = vmatprep.subr.mxu0 0.0
  %664 = vmatpush2.msra.mxu0 0.0
  %665 = vmatprep.subr.mxu0 0.0
  %666 = vmatpush2.msra.mxu0 0.0
  %667 = vmatprep.subr.mxu0 0.0
  %668 = vmatpush2.msra.mxu0 0.0
  %669 = vmatprep.mubr.f32.mxu0 0.0
  %670 = vmatmul.mubr.f32.gmra.mxu0 %v603
  %v671 = vpop.f32.mrf.mxu0
  %v672 = vadd.f32 0.0, %v671
  %v673 = vpop.f32.mrf.mxu0
  %674 = vdwg.mxu0
  %v675 = vadd.f32 %v125, %v672
  %v676 = vxor.u32 %v675, 2147483648
  %v677 = vmul.f32 %v676, 1.442695
  %v678 = vpow.pop %v677
  %v679 = vadd.f32 %v678, 1.0
  %v680 = vrcp.pop %v679
  %v681 = vmul.f32 1.0, %v680
  %v682 = vadd.f32 %v672, %v215
  %684 = vrot.lane.b32.xlu0 %v682, 64
  %v685 = vpop.permute.xlu0 %684
  %v687 = vmul.f32 %v681, %v685
  %689 = vrot.lane.b32.xlu0 %v687, 64
  %v690 = vpop.permute.xlu0 %689
  %v692 = vadd.f32 %v125, %v690
  %v693 = vtanh.pop %v692
  %v695 = vrot.slane %v693, 2
  %v697 = vsub.f32 %v593, %v695
  %v699 = vrot.slane %v697, 6
  %700 = vrot.lane.b32.xlu0 %v699, 96
  %v701 = vpop.permute.xlu0 %700
  %v703 = vmul.f32 %v681, %v701
  %705 = vrot.lane.b32.xlu0 %v703, 32
  %v706 = vpop.permute.xlu0 %705
  %v708 = vadd.f32 %v693, %v706
  %710 = vrot.lane.b32.xlu0 %v708, 64
  %v711 = vpop.permute.xlu0 %710
  %713 = vst.msk [vmem:[#allocation2 + $0x8] sm:$0x3] %vm244, %v711
  %v714 = vsel %vm128, %v711, 0
  %716 = vmatprep.subr.mxu0 0.0
  %717 = vmatpush1.msra.mxu0 0.0
  %718 = vmatprep.subr.mxu0 0.0
  %719 = vmatpush1.msra.mxu0 0.0
  %720 = vmatprep.subr.mxu0 0.0
  %721 = vmatpush1.msra.mxu0 0.0
  %722 = vmatprep.subr.mxu0 0.0
  %723 = vmatpush1.msra.mxu0 0.0
  %724 = vmatprep.subr.mxu0 0.0
  %725 = vmatpush1.msra.mxu0 0.0
  %726 = vmatprep.subr.mxu0 0.0
  %727 = vmatpush1.msra.mxu0 0.0
  %728 = vmatprep.subr.mxu0 0.0
  %729 = vmatpush1.msra.mxu0 0.0
  %730 = vmatprep.subr.mxu0 0.0
  %731 = vmatpush1.msra.mxu0 0.0
  %732 = vmatprep.subr.mxu0 0.0
  %733 = vmatpush1.msra.mxu0 0.0
  %734 = vmatprep.subr.mxu0 0.0
  %735 = vmatpush1.msra.mxu0 0.0
  %736 = vmatprep.subr.mxu0 0.0
  %737 = vmatpush1.msra.mxu0 0.0
  %738 = vmatprep.subr.mxu0 0.0
  %739 = vmatpush1.msra.mxu0 0.0
  %740 = vmatprep.subr.mxu0 0.0
  %741 = vmatpush1.msra.mxu0 %v31
  %742 = vmatprep.subr.mxu0 0.0
  %743 = vmatpush1.msra.mxu0 %v30
  %744 = vmatprep.subr.mxu0 0.0
  %745 = vmatpush1.msra.mxu0 %v29
  %746 = vmatprep.subr.mxu0 0.0
  %747 = vmatpush1.msra.mxu0 %v28
  %748 = vmatprep.subr.mxu0 0.0
  %749 = vmatpush2.msra.mxu0 0.0
  %750 = vmatprep.subr.mxu0 0.0
  %751 = vmatpush2.msra.mxu0 0.0
  %752 = vmatprep.subr.mxu0 0.0
  %753 = vmatpush2.msra.mxu0 0.0
  %754 = vmatprep.subr.mxu0 0.0
  %755 = vmatpush2.msra.mxu0 0.0
  %756 = vmatprep.subr.mxu0 0.0
  %757 = vmatpush2.msra.mxu0 0.0
  %758 = vmatprep.subr.mxu0 0.0
  %759 = vmatpush2.msra.mxu0 0.0
  %760 = vmatprep.subr.mxu0 0.0
  %761 = vmatpush2.msra.mxu0 0.0
  %762 = vmatprep.subr.mxu0 0.0
  %763 = vmatpush2.msra.mxu0 0.0
  %764 = vmatprep.subr.mxu0 0.0
  %765 = vmatpush2.msra.mxu0 0.0
  %766 = vmatprep.subr.mxu0 0.0
  %767 = vmatpush2.msra.mxu0 0.0
  %768 = vmatprep.subr.mxu0 0.0
  %769 = vmatpush2.msra.mxu0 0.0
  %770 = vmatprep.subr.mxu0 0.0
  %771 = vmatpush2.msra.mxu0 0.0
  %772 = vmatprep.subr.mxu0 0.0
  %773 = vmatpush2.msra.mxu0 0.0
  %774 = vmatprep.subr.mxu0 0.0
  %775 = vmatpush2.msra.mxu0 0.0
  %776 = vmatprep.subr.mxu0 0.0
  %777 = vmatpush2.msra.mxu0 0.0
  %778 = vmatprep.subr.mxu0 0.0
  %779 = vmatpush2.msra.mxu0 0.0
  %780 = vmatprep.mubr.f32.mxu0 0.0
  %781 = vmatmul.mubr.f32.gmra.mxu0 %v714
  %v782 = vpop.f32.mrf.mxu0
  %v783 = vadd.f32 0.0, %v782
  %v784 = vpop.f32.mrf.mxu0
  %785 = vdwg.mxu0
  %v787 = vrot.slane %v783, 6
  %v789 = vadd.f32 %v125, %v787
  %v790 = vxor.u32 %v789, 2147483648
  %v791 = vmul.f32 %v790, 1.442695
  %v792 = vpow.pop %v791
  %v793 = vadd.f32 %v792, 1.0
  %v794 = vrcp.pop %v793
  %v795 = vmul.f32 1.0, %v794
  %v796 = vadd.f32 %v783, %v215
  %v798 = vrot.slane %v796, 6
  %799 = vrot.lane.b32.xlu0 %v798, 64
  %v800 = vpop.permute.xlu0 %799
  %v802 = vmul.f32 %v795, %v800
  %804 = vrot.lane.b32.xlu0 %v802, 64
  %v805 = vpop.permute.xlu0 %804
  %v807 = vadd.f32 %v125, %v805
  %v808 = vtanh.pop %v807
  %v810 = vrot.slane %v808, 2
  %v812 = vsub.f32 %v708, %v810
  %v814 = vrot.slane %v812, 6
  %815 = vrot.lane.b32.xlu0 %v814, 96
  %v816 = vpop.permute.xlu0 %815
  %v818 = vmul.f32 %v795, %v816
  %820 = vrot.lane.b32.xlu0 %v818, 32
  %v821 = vpop.permute.xlu0 %820
  %v823 = vadd.f32 %v808, %v821
  %825 = vrot.lane.b32.xlu0 %v823, 64
  %v826 = vpop.permute.xlu0 %825
  %828 = vst.msk [vmem:[#allocation2 + $0x8] sm:$0xc] %vm360, %v826
  %v829 = vrot.slane %v823, 2
  %830 = vrot.lane.b32.xlu0 %v829, 64
  %v831 = vpop.permute.xlu0 %830
  %v832 = vsel %vm128, %v831, 0
  %834 = vmatprep.subr.mxu0 0.0
  %835 = vmatpush1.msra.mxu0 0.0
  %836 = vmatprep.subr.mxu0 0.0
  %837 = vmatpush1.msra.mxu0 0.0
  %838 = vmatprep.subr.mxu0 0.0
  %839 = vmatpush1.msra.mxu0 0.0
  %840 = vmatprep.subr.mxu0 0.0
  %841 = vmatpush1.msra.mxu0 0.0
  %842 = vmatprep.subr.mxu0 0.0
  %843 = vmatpush1.msra.mxu0 0.0
  %844 = vmatprep.subr.mxu0 0.0
  %845 = vmatpush1.msra.mxu0 0.0
  %846 = vmatprep.subr.mxu0 0.0
  %847 = vmatpush1.msra.mxu0 0.0
  %848 = vmatprep.subr.mxu0 0.0
  %849 = vmatpush1.msra.mxu0 0.0
  %850 = vmatprep.subr.mxu0 0.0
  %851 = vmatpush1.msra.mxu0 0.0
  %852 = vmatprep.subr.mxu0 0.0
  %853 = vmatpush1.msra.mxu0 0.0
  %854 = vmatprep.subr.mxu0 0.0
  %855 = vmatpush1.msra.mxu0 0.0
  %856 = vmatprep.subr.mxu0 0.0
  %857 = vmatpush1.msra.mxu0 0.0
  %858 = vmatprep.subr.mxu0 0.0
  %859 = vmatpush1.msra.mxu0 %v31
  %860 = vmatprep.subr.mxu0 0.0
  %861 = vmatpush1.msra.mxu0 %v30
  %862 = vmatprep.subr.mxu0 0.0
  %863 = vmatpush1.msra.mxu0 %v29
  %864 = vmatprep.subr.mxu0 0.0
  %865 = vmatpush1.msra.mxu0 %v28
  %866 = vmatprep.subr.mxu0 0.0
  %867 = vmatpush2.msra.mxu0 0.0
  %868 = vmatprep.subr.mxu0 0.0
  %869 = vmatpush2.msra.mxu0 0.0
  %870 = vmatprep.subr.mxu0 0.0
  %871 = vmatpush2.msra.mxu0 0.0
  %872 = vmatprep.subr.mxu0 0.0
  %873 = vmatpush2.msra.mxu0 0.0
  %874 = vmatprep.subr.mxu0 0.0
  %875 = vmatpush2.msra.mxu0 0.0
  %876 = vmatprep.subr.mxu0 0.0
  %877 = vmatpush2.msra.mxu0 0.0
  %878 = vmatprep.subr.mxu0 0.0
  %879 = vmatpush2.msra.mxu0 0.0
  %880 = vmatprep.subr.mxu0 0.0
  %881 = vmatpush2.msra.mxu0 0.0
  %882 = vmatprep.subr.mxu0 0.0
  %883 = vmatpush2.msra.mxu0 0.0
  %884 = vmatprep.subr.mxu0 0.0
  %885 = vmatpush2.msra.mxu0 0.0
  %886 = vmatprep.subr.mxu0 0.0
  %887 = vmatpush2.msra.mxu0 0.0
  %888 = vmatprep.subr.mxu0 0.0
  %889 = vmatpush2.msra.mxu0 0.0
  %890 = vmatprep.subr.mxu0 0.0
  %891 = vmatpush2.msra.mxu0 0.0
  %892 = vmatprep.subr.mxu0 0.0
  %893 = vmatpush2.msra.mxu0 0.0
  %894 = vmatprep.subr.mxu0 0.0
  %895 = vmatpush2.msra.mxu0 0.0
  %896 = vmatprep.subr.mxu0 0.0
  %897 = vmatpush2.msra.mxu0 0.0
  %898 = vmatprep.mubr.f32.mxu0 0.0
  %899 = vmatmul.mubr.f32.gmra.mxu0 %v832
  %v900 = vpop.f32.mrf.mxu0
  %v901 = vadd.f32 0.0, %v900
  %v902 = vpop.f32.mrf.mxu0
  %903 = vdwg.mxu0
  %v905 = vrot.slane %v901, 4
  %v907 = vadd.f32 %v125, %v905
  %v908 = vxor.u32 %v907, 2147483648
  %v909 = vmul.f32 %v908, 1.442695
  %v910 = vpow.pop %v909
  %v911 = vadd.f32 %v910, 1.0
  %v912 = vrcp.pop %v911
  %v913 = vmul.f32 1.0, %v912
  %v914 = vadd.f32 %v901, %v215
  %v916 = vrot.slane %v914, 4
  %917 = vrot.lane.b32.xlu0 %v916, 64
  %v918 = vpop.permute.xlu0 %917
  %v920 = vmul.f32 %v913, %v918
  %922 = vrot.lane.b32.xlu0 %v920, 64
  %v923 = vpop.permute.xlu0 %922
  %v925 = vadd.f32 %v125, %v923
  %v926 = vtanh.pop %v925
  %v928 = vrot.slane %v926, 2
  %v930 = vsub.f32 %v823, %v928
  %v932 = vrot.slane %v930, 6
  %933 = vrot.lane.b32.xlu0 %v932, 96
  %v934 = vpop.permute.xlu0 %933
  %v936 = vmul.f32 %v913, %v934
  %938 = vrot.lane.b32.xlu0 %v936, 32
  %v939 = vpop.permute.xlu0 %938
  %v941 = vadd.f32 %v926, %v939
  %943 = vrot.lane.b32.xlu0 %v941, 64
  %v944 = vpop.permute.xlu0 %943
  %946 = vst.msk [vmem:[#allocation2 + $0x8] sm:$0x30] %vm479, %v944
  %v947 = vrot.slane %v941, 4
  %948 = vrot.lane.b32.xlu0 %v947, 64
  %v949 = vpop.permute.xlu0 %948
  %v950 = vsel %vm128, %v949, 0
  %952 = vmatprep.subr.mxu0 0.0
  %953 = vmatpush1.msra.mxu0 0.0
  %954 = vmatprep.subr.mxu0 0.0
  %955 = vmatpush1.msra.mxu0 0.0
  %956 = vmatprep.subr.mxu0 0.0
  %957 = vmatpush1.msra.mxu0 0.0
  %958 = vmatprep.subr.mxu0 0.0
  %959 = vmatpush1.msra.mxu0 0.0
  %960 = vmatprep.subr.mxu0 0.0
  %961 = vmatpush1.msra.mxu0 0.0
  %962 = vmatprep.subr.mxu0 0.0
  %963 = vmatpush1.msra.mxu0 0.0
  %964 = vmatprep.subr.mxu0 0.0
  %965 = vmatpush1.msra.mxu0 0.0
  %966 = vmatprep.subr.mxu0 0.0
  %967 = vmatpush1.msra.mxu0 0.0
  %968 = vmatprep.subr.mxu0 0.0
  %969 = vmatpush1.msra.mxu0 0.0
  %970 = vmatprep.subr.mxu0 0.0
  %971 = vmatpush1.msra.mxu0 0.0
  %972 = vmatprep.subr.mxu0 0.0
  %973 = vmatpush1.msra.mxu0 0.0
  %974 = vmatprep.subr.mxu0 0.0
  %975 = vmatpush1.msra.mxu0 0.0
  %976 = vmatprep.subr.mxu0 0.0
  %977 = vmatpush1.msra.mxu0 %v31
  %978 = vmatprep.subr.mxu0 0.0
  %979 = vmatpush1.msra.mxu0 %v30
  %980 = vmatprep.subr.mxu0 0.0
  %981 = vmatpush1.msra.mxu0 %v29
  %982 = vmatprep.subr.mxu0 0.0
  %983 = vmatpush1.msra.mxu0 %v28
  %984 = vmatprep.subr.mxu0 0.0
  %985 = vmatpush2.msra.mxu0 0.0
  %986 = vmatprep.subr.mxu0 0.0
  %987 = vmatpush2.msra.mxu0 0.0
  %988 = vmatprep.subr.mxu0 0.0
  %989 = vmatpush2.msra.mxu0 0.0
  %990 = vmatprep.subr.mxu0 0.0
  %991 = vmatpush2.msra.mxu0 0.0
  %992 = vmatprep.subr.mxu0 0.0
  %993 = vmatpush2.msra.mxu0 0.0
  %994 = vmatprep.subr.mxu0 0.0
  %995 = vmatpush2.msra.mxu0 0.0
  %996 = vmatprep.subr.mxu0 0.0
  %997 = vmatpush2.msra.mxu0 0.0
  %998 = vmatprep.subr.mxu0 0.0
  %999 = vmatpush2.msra.mxu0 0.0
  %1000 = vmatprep.subr.mxu0 0.0
  %1001 = vmatpush2.msra.mxu0 0.0
  %1002 = vmatprep.subr.mxu0 0.0
  %1003 = vmatpush2.msra.mxu0 0.0
  %1004 = vmatprep.subr.mxu0 0.0
  %1005 = vmatpush2.msra.mxu0 0.0
  %1006 = vmatprep.subr.mxu0 0.0
  %1007 = vmatpush2.msra.mxu0 0.0
  %1008 = vmatprep.subr.mxu0 0.0
  %1009 = vmatpush2.msra.mxu0 0.0
  %1010 = vmatprep.subr.mxu0 0.0
  %1011 = vmatpush2.msra.mxu0 0.0
  %1012 = vmatprep.subr.mxu0 0.0
  %1013 = vmatpush2.msra.mxu0 0.0
  %1014 = vmatprep.subr.mxu0 0.0
  %1015 = vmatpush2.msra.mxu0 0.0
  %1016 = vmatprep.mubr.f32.mxu0 0.0
  %1017 = vmatmul.mubr.f32.gmra.mxu0 %v950
  %v1018 = vpop.f32.mrf.mxu0
  %v1019 = vadd.f32 0.0, %v1018
  %v1020 = vpop.f32.mrf.mxu0
  %1021 = vdwg.mxu0
  %v1023 = vrot.slane %v1019, 2
  %v1025 = vadd.f32 %v125, %v1023
  %v1026 = vxor.u32 %v1025, 2147483648
  %v1027 = vmul.f32 %v1026, 1.442695
  %v1028 = vpow.pop %v1027
  %v1029 = vadd.f32 %v1028, 1.0
  %v1030 = vrcp.pop %v1029
  %v1031 = vmul.f32 1.0, %v1030
  %v1032 = vadd.f32 %v1019, %v215
  %v1034 = vrot.slane %v1032, 2
  %1035 = vrot.lane.b32.xlu0 %v1034, 64
  %v1036 = vpop.permute.xlu0 %1035
  %v1038 = vmul.f32 %v1031, %v1036
  %1040 = vrot.lane.b32.xlu0 %v1038, 64
  %v1041 = vpop.permute.xlu0 %1040
  %v1043 = vadd.f32 %v125, %v1041
  %v1044 = vtanh.pop %v1043
  %v1046 = vrot.slane %v1044, 2
  %v1048 = vsub.f32 %v941, %v1046
  %v1050 = vrot.slane %v1048, 6
  %1051 = vrot.lane.b32.xlu0 %v1050, 96
  %v1052 = vpop.permute.xlu0 %1051
  %v1054 = vmul.f32 %v1031, %v1052
  %1056 = vrot.lane.b32.xlu0 %v1054, 32
  %v1057 = vpop.permute.xlu0 %1056
  %v1059 = vadd.f32 %v1044, %v1057
  %1061 = vrot.lane.b32.xlu0 %v1059, 64
  %v1062 = vpop.permute.xlu0 %1061
  %1064 = vst.msk [vmem:[#allocation2 + $0x8] sm:$0xc0] %vm598, %v1062
  %v1065 = vld [vmem:[#allocation2] sm:$0xff]
  %v1066 = vld [vmem:[#allocation2 + $0x8] sm:$0xff]
  %v1068 = vlaneseq
  %v1069 = vshrl.u32 %v1068, 7
  %v1070 = vsub.s32 0, %v1069
  %v1071 = vrot.slane %v37, %v1070
  %v1074 = vsel %vm128, %v1065, 0
  %v1077 = vsel %vm128, %v1066, 0
  %1079 = vmatprep.subr.mxu0 0.0
  %1080 = vmatpush1.msra.mxu0 0.0
  %1081 = vmatprep.subr.mxu0 0.0
  %1082 = vmatpush1.msra.mxu0 0.0
  %1083 = vmatprep.subr.mxu0 0.0
  %1084 = vmatpush1.msra.mxu0 0.0
  %1085 = vmatprep.subr.mxu0 0.0
  %1086 = vmatpush1.msra.mxu0 0.0
  %1087 = vmatprep.subr.mxu0 0.0
  %1088 = vmatpush1.msra.mxu0 0.0
  %1089 = vmatprep.subr.mxu0 0.0
  %1090 = vmatpush1.msra.mxu0 0.0
  %1091 = vmatprep.subr.mxu0 0.0
  %1092 = vmatpush1.msra.mxu0 0.0
  %1093 = vmatprep.subr.mxu0 0.0
  %1094 = vmatpush1.msra.mxu0 0.0
  %1095 = vmatprep.subr.mxu0 0.0
  %1096 = vmatpush1.msra.mxu0 0.0
  %1097 = vmatprep.subr.mxu0 0.0
  %1098 = vmatpush1.msra.mxu0 0.0
  %1099 = vmatprep.subr.mxu0 0.0
  %1100 = vmatpush1.msra.mxu0 0.0
  %1101 = vmatprep.subr.mxu0 0.0
  %1102 = vmatpush1.msra.mxu0 0.0
  %1103 = vmatprep.subr.mxu0 0.0
  %1104 = vmatpush1.msra.mxu0 %v36
  %1105 = vmatprep.subr.mxu0 0.0
  %1106 = vmatpush1.msra.mxu0 %v35
  %1107 = vmatprep.subr.mxu0 0.0
  %1108 = vmatpush1.msra.mxu0 %v34
  %1109 = vmatprep.subr.mxu0 0.0
  %1110 = vmatpush1.msra.mxu0 %v33
  %1111 = vmatprep.subr.mxu0 0.0
  %1112 = vmatpush2.msra.mxu0 0.0
  %1113 = vmatprep.subr.mxu0 0.0
  %1114 = vmatpush2.msra.mxu0 0.0
  %1115 = vmatprep.subr.mxu0 0.0
  %1116 = vmatpush2.msra.mxu0 0.0
  %1117 = vmatprep.subr.mxu0 0.0
  %1118 = vmatpush2.msra.mxu0 0.0
  %1119 = vmatprep.subr.mxu0 0.0
  %1120 = vmatpush2.msra.mxu0 0.0
  %1121 = vmatprep.subr.mxu0 0.0
  %1122 = vmatpush2.msra.mxu0 0.0
  %1123 = vmatprep.subr.mxu0 0.0
  %1124 = vmatpush2.msra.mxu0 0.0
  %1125 = vmatprep.subr.mxu0 0.0
  %1126 = vmatpush2.msra.mxu0 0.0
  %1127 = vmatprep.subr.mxu0 0.0
  %1128 = vmatpush2.msra.mxu0 0.0
  %1129 = vmatprep.subr.mxu0 0.0
  %1130 = vmatpush2.msra.mxu0 0.0
  %1131 = vmatprep.subr.mxu0 0.0
  %1132 = vmatpush2.msra.mxu0 0.0
  %1133 = vmatprep.subr.mxu0 0.0
  %1134 = vmatpush2.msra.mxu0 0.0
  %1135 = vmatprep.subr.mxu0 0.0
  %1136 = vmatpush2.msra.mxu0 0.0
  %1137 = vmatprep.subr.mxu0 0.0
  %1138 = vmatpush2.msra.mxu0 0.0
  %1139 = vmatprep.subr.mxu0 0.0
  %1140 = vmatpush2.msra.mxu0 0.0
  %1141 = vmatprep.subr.mxu0 0.0
  %1142 = vmatpush2.msra.mxu0 0.0
  %1143 = vmatprep.mubr.f32.mxu0 0.0
  %1144 = vmatmul.mubr.f32.gmra.mxu0 %v1074
  %v1145 = vpop.f32.mrf.mxu0
  %v1146 = vadd.f32 %v1071, %v1145
  %v1147 = vpop.f32.mrf.mxu0
  %1148 = vmatprep.mubr.f32.mxu0 0.0
  %1149 = vmatmul.mubr.f32.gmra.mxu0 %v1077
  %v1150 = vpop.f32.mrf.mxu0
  %v1151 = vadd.f32 %v1071, %v1150
  %v1152 = vpop.f32.mrf.mxu0
  %1153 = vdwg.mxu0
  %vm1154 = vcmask 31744
  %1155 = vst.msk [vmem:[%s7] sm:$0xff] %vm1154, %v1146
  %1156 = vst.msk [vmem:[%s7 + $0x8] sm:$0xff] %vm1154, %v1151
  // Predicated region
  $region30: #{tpu_custom_call.1} parent=0 // pred_check
    _
  $region31: #{tpu_custom_call.1} parent=0 // pred_check_branch
    %1158 = sbr.rel (0) target = $region33
  $region32: #{tpu_custom_call.1} parent=0 // pred_region
    _
  $region33: #{tpu_custom_call.1} parent=0 // pred_fallthru
    _
  // Predicated region
  $region34: #{tpu_custom_call.1} parent=0 // pred_check
    _
  $region35: #{tpu_custom_call.1} parent=0 // pred_check_branch
    %1160 = sbr.rel (0) target = $region37
  $region36: #{tpu_custom_call.1} parent=0 // pred_region
    _
  $region37: #{tpu_custom_call.1} parent=0 // pred_fallthru
    _

</llo_original>
